<compile_context>
chip_gen: v7x
topology: tpu7x:2x2x1
jax: 0.10.0
libtpu: 0.0.40
codegen_flags: <defaults>
</compile_context>

<pallas_src>
import functools

import numpy as np
import jax
import jax.numpy as jnp
from jax.experimental import pallas as pl
from jax.experimental.pallas import tpu as pltpu


def _round_up(x, m):
    return ((x + m - 1) // m) * m


def _cdiv(a, b):
    return (a + b - 1) // b


def _gaussian_falloff_velocity_kernel(params_ref, w_ref, pts_ref, out_ref, s_acc):
    # params_ref: (1, C, TN, 4)  columns = [y, x, tau/(2*pi), -1/sigma^2]
    # w_ref:      (1, C, 8, TN)  rows    = [1, x, y, 0, 0, 0, 0, 0]
    # pts_ref:    (1, 2, TP)     rows    = [p_y, p_x]         (TP on lanes)
    # out_ref:    (1, 2, TP)     rows    = [u, v]
    # s_acc:      (8, TP) f32 scratch accumulator (used only when C > 1)
    num_chunks = params_ref.shape[1]

    py = pts_ref[0, 0:1, :]      # (1, TP)
    px = pts_ref[0, 1:2, :]      # (1, TP)

    def chunk_moments(c):
        prm = params_ref[0, c, :, :]          # (TN, 4)
        y = prm[:, 0:1]                       # (TN, 1)
        x = prm[:, 1:2]
        coef = prm[:, 2:3]                    # tau / (2*pi)
        neg_inv_s2 = prm[:, 3:4]              # -1 / sigma^2
        dy = py - y                           # (TN, TP)
        dx = px - x                           # (TN, TP)
        sq = dy * dy + dx * dx                # (TN, TP)
        # strength = tau * (1 - exp(-sq/sigma^2)) / (2*pi*sq); exact f32 divide
        # (the previous approx reciprocal caused the accuracy failure).
        strength = coef * (1.0 - jnp.exp(sq * neg_inv_s2)) / sq
        # Weighted reduction over N on the MXU:
        #   row0 = sum_n strength, row1 = sum_n x_n*strength, row2 = sum_n y_n*strength
        return jnp.dot(w_ref[0, c, :, :], strength,
                       preferred_element_type=jnp.float32)   # (8, TP)

    if num_chunks == 1:
        moments = chunk_moments(0)
    else:
        s_acc[...] = chunk_moments(0)

        def body(c, carry):
            s_acc[...] = s_acc[...] + chunk_moments(c)
            return carry

        jax.lax.fori_loop(1, num_chunks, body, 0)
        moments = s_acc[...]

    s1 = moments[0:1, :]
    sx = moments[1:2, :]
    sy = moments[2:3, :]
    u = px * s1 - sx             # = sum_n strength * dx
    v = sy - py * s1             # = -sum_n strength * dy
    out_ref[0, :, :] = jnp.concatenate([u, v], axis=0)   # one (2, TP) store


@functools.partial(jax.jit, static_argnames=("max_tile_p", "max_tile_n"))
def gaussian_falloff_velocity(vortex_feature, points, *, max_tile_p=2048,
                              max_tile_n=128):
    """vortex_feature: (B, N, 4), points: (B, H, W, 2) -> (B, H, W, 2)."""
    B, N, F = vortex_feature.shape
    assert F == 4
    _, H, W, two = points.shape
    assert two == 2
    P = H * W
    f32 = jnp.float32

    vf = vortex_feature.astype(f32)
    y, x, tau, sig = vf[..., 0], vf[..., 1], vf[..., 2], vf[..., 3]
    coef = tau * (1.0 / (2.0 * np.pi))        # hoisted: tau / (2*pi)
    neg_inv_s2 = -1.0 / (sig * sig)           # hoisted: -1 / sigma^2

    # ----- N chunking (in-kernel reduction loop; balanced to minimize pad) ----
    if N <= max_tile_n:
        num_chunks = 1
        tile_n = _round_up(N, 8)
    else:
        num_chunks = _cdiv(N, max_tile_n)
        tile_n = _round_up(_cdiv(N, num_chunks), 8)
    N_pad = num_chunks * tile_n

    def pad_n(a, val):
        if N_pad == N:
            return a
        return jnp.pad(a, ((0, 0), (0, N_pad - N)), constant_values=val)

    # Pad vortices at +1e6 (points padded at -1e6), zero circulation -> exactly
    # zero contribution and sq never 0 on pad-pad pairs (no NaNs anywhere).
    yp = pad_n(y, 1e6)
    xp = pad_n(x, 1e6)
    cp = pad_n(coef, 0.0)
    sp = pad_n(neg_inv_s2, -1.0)

    params = jnp.stack([yp, xp, cp, sp], axis=-1)          # (B, N_pad, 4)
    params = params.reshape(B, num_chunks, tile_n, 4)      # (B, C, TN, 4)

    ones = jnp.ones_like(xp)
    zeros = jnp.zeros_like(xp)
    wrows = jnp.stack([ones, xp, yp] + [zeros] * 5, axis=1)          # (B, 8, N_pad)
    wmat = wrows.reshape(B, 8, num_chunks, tile_n).transpose(0, 2, 1, 3)  # (B,C,8,TN)

    # ----- P tiling (lane axis; balanced; >=2 parallel steps when B == 1) -----
    P_pad128 = _round_up(P, 128)
    num_p = _cdiv(P_pad128, _round_up(max_tile_p, 128))
    if B == 1 and num_p < 2 and P_pad128 > 128:
        num_p = 2                 # v7x megacore: give both TensorCores work
    tile_p = _round_up(_cdiv(P_pad128, num_p), 128)
    P_pad = num_p * tile_p

    # Channel-first points (B, 2, P): P on lanes -> lane-dense loads/stores.
    pts_cf = jnp.transpose(points.astype(f32).reshape(B, P, 2), (0, 2, 1))
    if P_pad != P:
        pts_cf = jnp.pad(pts_cf, ((0, 0), (0, 0), (0, P_pad - P)),
                         constant_values=-1e6)

    grid = (B, num_p)

    out_cf = pl.pallas_call(
        _gaussian_falloff_velocity_kernel,
        out_shape=jax.ShapeDtypeStruct((B, 2, P_pad), f32),
        grid_spec=pltpu.PrefetchScalarGridSpec(
            num_scalar_prefetch=0,
            grid=grid,
            in_specs=[
                # Tiny per-vortex params + MXU weight rows: full-N resident
                # blocks, re-used across all P tiles of the same batch.
                pl.BlockSpec((1, num_chunks, tile_n, 4), lambda b, p: (b, 0, 0, 0)),
                pl.BlockSpec((1, num_chunks, 8, tile_n), lambda b, p: (b, 0, 0, 0)),
                pl.BlockSpec((1, 2, tile_p), lambda b, p: (b, 0, p)),
            ],
            out_specs=pl.BlockSpec((1, 2, tile_p), lambda b, p: (b, 0, p)),
            scratch_shapes=[pltpu.VMEM((8, tile_p), jnp.float32)],
        ),
        compiler_params=pltpu.CompilerParams(
            dimension_semantics=("parallel", "parallel")),
    )(params, wmat, pts_cf)

    out = jnp.transpose(out_cf[:, :, :P], (0, 2, 1)).reshape(B, H, W, 2)
    return out


def _reference(vortex_feature, points):
    # Pure-JAX mirror of the PyTorch forward, for validation.
    y = vortex_feature[..., 0]
    x = vortex_feature[..., 1]
    tau = vortex_feature[..., 2]
    sig = vortex_feature[..., 3]
    loc = jnp.stack([y, x], axis=-1)                       # (B, N, 2)
    pts = points[..., None, :]                             # (B, H, W, 1, 2)
    src_loc = loc[:, None, None, :, :]                     # (B, 1, 1, N, 2)
    src_tau = tau[:, None, None, :, None]                  # (B, 1, 1, N, 1)
    src_sig = sig[:, None, None, :, None]                  # (B, 1, 1, N, 1)
    dist = pts - src_loc                                   # (B, H, W, N, 2)
    sq = jnp.sum(dist ** 2, axis=-1, keepdims=True)
    falloff = (1.0 - jnp.exp(-sq / src_sig ** 2)) / (2.0 * np.pi * sq)
    strength = src_tau * falloff
    d1 = dist[..., 0]
    d2 = dist[..., 1]
    vel = strength * jnp.stack([d2, -d1], axis=-1)
    return jnp.sum(vel, axis=-2)


if __name__ == "__main__":
    key = jax.random.PRNGKey(0)
    k1, k2, k3, k4 = jax.random.split(key, 4)

    B, N, H, W = 2, 8, 16, 16

    yx = jax.random.uniform(k1, (B, N, 2), jnp.float32, minval=-1.0, maxval=1.0)
    tau = jax.random.normal(k2, (B, N, 1), jnp.float32)
    sig = 0.2 + jax.random.uniform(k3, (B, N, 1), jnp.float32, maxval=0.5)
    vortex_feature = jnp.concatenate([yx, tau, sig], axis=-1)      # (B, N, 4)

    points = jax.random.uniform(k4, (B, H, W, 2), jnp.float32,
                                minval=-1.0, maxval=1.0)           # (B, H, W, 2)

    out = gaussian_falloff_velocity(vortex_feature, points)
    out = jax.block_until_ready(out)

    ref = _reference(vortex_feature, points)
    # Tolerance covers the reassociated reduction order (MXU matmul over N and
    # the factored u = px*S1 - Sx / v = Sy - py*S1 algebra); the divide and exp
    # are exact f32 as in the reference.
    np.testing.assert_allclose(np.asarray(out), np.asarray(ref),
                               rtol=2e-3, atol=2e-4)

    print("KERNEL_OK")
</pallas_src>

<mosaic_0001>
module attributes {stable_mosaic.version = 11 : i64} {
  func.func @_gaussian_falloff_velocity_kernel(%arg0: i32, %arg1: i32, %arg2: memref<1x1x8x4xf32, #tpu.memory_space<vmem>>, %arg3: memref<1x1x8x8xf32, #tpu.memory_space<vmem>>, %arg4: memref<1x2x256xf32, #tpu.memory_space<vmem>>, %arg5: memref<1x2x256xf32, #tpu.memory_space<vmem>>, %arg6: memref<8x256xf32, #tpu.memory_space<vmem>>) attributes {dimension_semantics = [#tpu.dimension_semantics<parallel>, #tpu.dimension_semantics<parallel>], iteration_bounds = array<i64: 2, 1>, scalar_prefetch = 0 : i64, scratch_operands = 1 : i64, tpu.core_type = #tpu.core_type<tc>, window_params = [{transform_indices = @transform_0, window_bounds = array<i64: 1, 1, 8, 4>}, {transform_indices = @transform_1, window_bounds = array<i64: 1, 1, 8, 8>}, {transform_indices = @transform_2, window_bounds = array<i64: 1, 2, 256>}, {transform_indices = @transform_3, window_bounds = array<i64: 1, 2, 256>}]} {
    %c0 = arith.constant 0 : index
    %c0_0 = arith.constant 0 : index
    %c0_1 = arith.constant 0 : index
    %0 = vector.load %arg4[%c0, %c0_0, %c0_1] : memref<1x2x256xf32, #tpu.memory_space<vmem>>, vector<1x1x256xf32>
    %1 = vector.shape_cast %0 : vector<1x1x256xf32> to vector<1x256xf32>
    %c0_2 = arith.constant 0 : index
    %c1 = arith.constant 1 : index
    %c0_3 = arith.constant 0 : index
    %2 = vector.load %arg4[%c0_2, %c1, %c0_3] : memref<1x2x256xf32, #tpu.memory_space<vmem>>, vector<1x1x256xf32>
    %3 = vector.shape_cast %2 : vector<1x1x256xf32> to vector<1x256xf32>
    %c0_4 = arith.constant 0 : index
    %c0_5 = arith.constant 0 : index
    %c0_6 = arith.constant 0 : index
    %c0_7 = arith.constant 0 : index
    %4 = vector.load %arg2[%c0_4, %c0_5, %c0_6, %c0_7] : memref<1x1x8x4xf32, #tpu.memory_space<vmem>>, vector<1x1x8x4xf32>
    %5 = vector.shape_cast %4 : vector<1x1x8x4xf32> to vector<8x4xf32>
    %6 = vector.extract_strided_slice %5 {offsets = [0, 0], sizes = [8, 1], strides = [1, 1]} : vector<8x4xf32> to vector<8x1xf32>
    %7 = vector.extract_strided_slice %5 {offsets = [0, 1], sizes = [8, 1], strides = [1, 1]} : vector<8x4xf32> to vector<8x1xf32>
    %8 = vector.extract_strided_slice %5 {offsets = [0, 2], sizes = [8, 1], strides = [1, 1]} : vector<8x4xf32> to vector<8x1xf32>
    %9 = vector.extract_strided_slice %5 {offsets = [0, 3], sizes = [8, 1], strides = [1, 1]} : vector<8x4xf32> to vector<8x1xf32>
    %10 = vector.broadcast %1 : vector<1x256xf32> to vector<8x256xf32>
    %11 = vector.broadcast %6 : vector<8x1xf32> to vector<8x256xf32>
    %12 = arith.subf %10, %11 : vector<8x256xf32>
    %13 = vector.broadcast %3 : vector<1x256xf32> to vector<8x256xf32>
    %14 = vector.broadcast %7 : vector<8x1xf32> to vector<8x256xf32>
    %15 = arith.subf %13, %14 : vector<8x256xf32>
    %16 = arith.mulf %12, %12 : vector<8x256xf32>
    %17 = arith.mulf %15, %15 : vector<8x256xf32>
    %18 = arith.addf %16, %17 : vector<8x256xf32>
    %19 = vector.broadcast %9 : vector<8x1xf32> to vector<8x256xf32>
    %20 = arith.mulf %18, %19 : vector<8x256xf32>
    %21 = math.exp %20 : vector<8x256xf32>
    %cst = arith.constant 1.000000e+00 : f32
    %22 = vector.broadcast %cst : f32 to vector<8x256xf32>
    %23 = arith.subf %22, %21 : vector<8x256xf32>
    %24 = vector.broadcast %8 : vector<8x1xf32> to vector<8x256xf32>
    %25 = arith.mulf %24, %23 : vector<8x256xf32>
    %26 = arith.divf %25, %18 : vector<8x256xf32>
    %c0_8 = arith.constant 0 : index
    %c0_9 = arith.constant 0 : index
    %c0_10 = arith.constant 0 : index
    %c0_11 = arith.constant 0 : index
    %27 = vector.load %arg3[%c0_8, %c0_9, %c0_10, %c0_11] : memref<1x1x8x8xf32, #tpu.memory_space<vmem>>, vector<1x1x8x8xf32>
    %28 = vector.shape_cast %27 : vector<1x1x8x8xf32> to vector<8x8xf32>
    %cst_12 = arith.constant dense<0.000000e+00> : vector<8x256xf32>
    %29 = tpu.matmul %28, %26, %cst_12 {dimension_numbers = #tpu.dot_dimension_numbers<[1], [0], [0], [1], [0, 0, 1, 1], [], []>} : vector<8x8xf32>, vector<8x256xf32>, vector<8x256xf32> -> vector<8x256xf32>
    %30 = vector.extract_strided_slice %29 {offsets = [0, 0], sizes = [1, 256], strides = [1, 1]} : vector<8x256xf32> to vector<1x256xf32>
    %31 = vector.extract_strided_slice %29 {offsets = [1, 0], sizes = [1, 256], strides = [1, 1]} : vector<8x256xf32> to vector<1x256xf32>
    %32 = vector.extract_strided_slice %29 {offsets = [2, 0], sizes = [1, 256], strides = [1, 1]} : vector<8x256xf32> to vector<1x256xf32>
    %33 = arith.mulf %3, %30 : vector<1x256xf32>
    %34 = arith.subf %33, %31 : vector<1x256xf32>
    %35 = arith.mulf %1, %30 : vector<1x256xf32>
    %36 = arith.subf %32, %35 : vector<1x256xf32>
    %37 = tpu.concatenate %34, %36 in 0 : vector<1x256xf32>, vector<1x256xf32> -> vector<2x256xf32>
    %c0_13 = arith.constant 0 : index
    %c0_14 = arith.constant 0 : index
    %c0_15 = arith.constant 0 : index
    %38 = vector.load %arg5[%c0_13, %c0_14, %c0_15] : memref<1x2x256xf32, #tpu.memory_space<vmem>>, vector<1x2x256xf32>
    %39 = vector.shape_cast %38 : vector<1x2x256xf32> to vector<2x256xf32>
    %40 = vector.shape_cast %37 : vector<2x256xf32> to vector<1x2x256xf32>
    tpu.vector_store %arg5[%c0_13, %c0_14, %c0_15], %40 {strides = array<i32>} : memref<1x2x256xf32, #tpu.memory_space<vmem>>, vector<1x2x256xf32>,
    return
  }
  func.func @transform_0(%arg0: i32, %arg1: i32) -> (i32, i32, i32, i32) {
    %c0_i32 = arith.constant 0 : i32
    %c0_i32_0 = arith.constant 0 : i32
    %c0_i32_1 = arith.constant 0 : i32
    %c0_i32_2 = arith.constant 0 : i32
    return %arg0, %c0_i32, %c0_i32_0, %c0_i32_1 : i32, i32, i32, i32
  }
  func.func @transform_1(%arg0: i32, %arg1: i32) -> (i32, i32, i32, i32) {
    %c0_i32 = arith.constant 0 : i32
    %c0_i32_0 = arith.constant 0 : i32
    %c0_i32_1 = arith.constant 0 : i32
    %c0_i32_2 = arith.constant 0 : i32
    return %arg0, %c0_i32, %c0_i32_0, %c0_i32_1 : i32, i32, i32, i32
  }
  func.func @transform_2(%arg0: i32, %arg1: i32) -> (i32, i32, i32) {
    %c0_i32 = arith.constant 0 : i32
    %c0_i32_0 = arith.constant 0 : i32
    return %arg0, %c0_i32, %arg1 : i32, i32, i32
  }
  func.func @transform_3(%arg0: i32, %arg1: i32) -> (i32, i32, i32) {
    %c0_i32 = arith.constant 0 : i32
    %c0_i32_0 = arith.constant 0 : i32
    return %arg0, %c0_i32, %arg1 : i32, i32, i32
  }
}

</mosaic_0001>

<llo_original>
// kernel: gaussian_falloff_velocity.1
$region0: #{gaussian_falloff_velocity.1}
  #allocation0 [shape = 'u32[]', space=smem, size = 0x4, offset = 0x4, fixed_abs, tag = 'smem constant byte address 0x4 - core index']
  #allocation1 [shape = 'u32[144,128]{1,0:T(1,128)}', space=vmem, size = 0x12000, scoped, tag = 'internal scratch']
  #allocation2 [shape = 'f32[8,256]{1,0:T(8,128)}', space=vmem, size = 0x2000, scoped, tag = 'scratch operand']
  %s0 = inlined_call_operand.vmem [shape: f32[2,1,8,4], index: 0, kind: input, shape index: {}]
  %s1 = inlined_call_operand.vmem [shape: f32[2,1,8,8], index: 1, kind: input, shape index: {}]
  %s2 = inlined_call_operand.vmem [shape: f32[2,2,256], index: 2, kind: input, shape index: {}]
  %s3 = inlined_call_operand.vmem [shape: f32[2,2,256], index: 3, kind: output, shape index: {}]
  %s4 = sld [smem:[#allocation0]]
  $region45: #{gaussian_falloff_velocity.1} parent=0
    _
  %s6 = ssub.s32 1, %s4
  %s7 = scalar_select 0, %s6, %s4
  loop: start=0, step=1, limit=4
  $region2: #{gaussian_falloff_velocity.1} parent=0 // loop_pre_header
    _
  $region3: #{gaussian_falloff_velocity.1} parent=0 // loop_header
    %s9 = sphi 0, %s13
    %p10 = scmp.ge.s32.totalorder %s9, 4
    %s16 = sphi 0, %s28
    %s17 = sphi 0, %s24
    %s18 = sphi 0, %s16
    %s19 = sphi 0, %s17
    %s20 = sphi 0, %s18
    %s21 = sphi 0, %s19
    %s31 = sphi 0, %s33
    %s34 = sphi 0, %s31
    %s35 = sphi 0, %s34
    %s51 = sphi 0, %s35
    %s57 = sphi 0, %s59
    %s60 = sphi 0, %s57
    %s61 = sphi 0, %s60
    %s77 = sphi 0, %s61
    %s85 = sphi 0, %s87
    %s88 = sphi 0, %s85
    %s89 = sphi 0, %s88
    %s105 = sphi 0, %s89
    %s113 = sphi 0, %s115
    %s116 = sphi 0, %s113
    %s117 = sphi 0, %s116
    %s133 = sphi 0, %s117
  $region4: #{gaussian_falloff_velocity.1} parent=0 // loop_header_branch
    %12 = sbr.rel (%p10) target = $region8
  $region5: #{gaussian_falloff_velocity.1} parent=0 // loop_body
    %s14 = ssub.s32 %s9, 1
    %s15 = ssub.s32 %s9, 2
    %s22 = sadd.s32 1, %s17
    %p23 = scmp.ge.s32.totalorder %s22, 1
    %s24 = scalar_select %p23, 0, %s22
    %s25 = sadd.s32 1, %s16
    %s26 = scalar_select %p23, %s25, %s16
    %p27 = scmp.ge.s32.totalorder %s26, 2
    %s28 = scalar_select %p27, 0, %s26
    %s29 = ssub.s32 %s16, %s28
    %p30 = scmp.eq.s32.totalorder %s29, 0
    %s32 = sadd.s32 %s31, 1
    %s33 = scalar_select %p30, %s31, %s32
    %p36 = pneg %p30
    %p37 = scmp.eq.s32.totalorder %s9, 1
    %p38 = por %p36, %p37
    %p39 = scmp.ne.s32.totalorder %s31, %s34
    %p40 = scmp.eq.s32.totalorder %s9, 0
    %p41 = por %p39, %p40
    %p42 = scmp.ne.s32.totalorder %s31, %s34
    %p43 = scmp.eq.s32.totalorder %s14, 1
    %p44 = por %p42, %p43
    %p45 = scmp.ne.s32.totalorder %s34, %s35
    %p46 = scmp.eq.s32.totalorder %s14, 0
    %p47 = por %p45, %p46
    %p48 = scmp.ne.s32.totalorder %s34, %s35
    %p49 = scmp.eq.s32.totalorder %s15, 1
    %p50 = por %p48, %p49
    %p52 = scmp.ne.s32.totalorder %s35, %s51
    %p53 = scmp.eq.s32.totalorder %s15, 0
    %p54 = por %p52, %p53
    %s55 = ssub.s32 %s16, %s28
    %p56 = scmp.eq.s32.totalorder %s55, 0
    %s58 = sadd.s32 %s57, 1
    %s59 = scalar_select %p56, %s57, %s58
    %p62 = pneg %p56
    %p63 = scmp.eq.s32.totalorder %s9, 1
    %p64 = por %p62, %p63
    %p65 = scmp.ne.s32.totalorder %s57, %s60
    %p66 = scmp.eq.s32.totalorder %s9, 0
    %p67 = por %p65, %p66
    %p68 = scmp.ne.s32.totalorder %s57, %s60
    %p69 = scmp.eq.s32.totalorder %s14, 1
    %p70 = por %p68, %p69
    %p71 = scmp.ne.s32.totalorder %s60, %s61
    %p72 = scmp.eq.s32.totalorder %s14, 0
    %p73 = por %p71, %p72
    %p74 = scmp.ne.s32.totalorder %s60, %s61
    %p75 = scmp.eq.s32.totalorder %s15, 1
    %p76 = por %p74, %p75
    %p78 = scmp.ne.s32.totalorder %s61, %s77
    %p79 = scmp.eq.s32.totalorder %s15, 0
    %p80 = por %p78, %p79
    %s81 = ssub.s32 %s16, %s28
    %s82 = ssub.s32 %s17, %s24
    %s83 = sor.u32 %s81, %s82
    %p84 = scmp.eq.s32.totalorder %s83, 0
    %s86 = sadd.s32 %s85, 1
    %s87 = scalar_select %p84, %s85, %s86
    %p90 = pneg %p84
    %p91 = scmp.eq.s32.totalorder %s9, 1
    %p92 = por %p90, %p91
    %p93 = scmp.ne.s32.totalorder %s85, %s88
    %p94 = scmp.eq.s32.totalorder %s9, 0
    %p95 = por %p93, %p94
    %p96 = scmp.ne.s32.totalorder %s85, %s88
    %p97 = scmp.eq.s32.totalorder %s14, 1
    %p98 = por %p96, %p97
    %p99 = scmp.ne.s32.totalorder %s88, %s89
    %p100 = scmp.eq.s32.totalorder %s14, 0
    %p101 = por %p99, %p100
    %p102 = scmp.ne.s32.totalorder %s88, %s89
    %p103 = scmp.eq.s32.totalorder %s15, 1
    %p104 = por %p102, %p103
    %p106 = scmp.ne.s32.totalorder %s89, %s105
    %p107 = scmp.eq.s32.totalorder %s15, 0
    %p108 = por %p106, %p107
    %s109 = ssub.s32 %s16, %s28
    %s110 = ssub.s32 %s17, %s24
    %s111 = sor.u32 %s109, %s110
    %p112 = scmp.eq.s32.totalorder %s111, 0
    %s114 = sadd.s32 %s113, 1
    %s115 = scalar_select %p112, %s113, %s114
    %p118 = pneg %p112
    %p119 = scmp.eq.s32.totalorder %s9, 1
    %p120 = por %p118, %p119
    %p121 = scmp.ne.s32.totalorder %s113, %s116
    %p122 = scmp.eq.s32.totalorder %s9, 0
    %p123 = por %p121, %p122
    %p124 = scmp.ne.s32.totalorder %s113, %s116
    %p125 = scmp.eq.s32.totalorder %s14, 1
    %p126 = por %p124, %p125
    %p127 = scmp.ne.s32.totalorder %s116, %s117
    %p128 = scmp.eq.s32.totalorder %s14, 0
    %p129 = por %p127, %p128
    %p130 = scmp.ne.s32.totalorder %s116, %s117
    %p131 = scmp.eq.s32.totalorder %s15, 1
    %p132 = por %p130, %p131
    %p134 = scmp.ne.s32.totalorder %s117, %s133
    %p135 = scmp.eq.s32.totalorder %s15, 0
    %p136 = por %p134, %p135
    %p137 = scmp.le.s32.totalorder 1, %s9
    %p138 = scmp.lt.s32.totalorder %s9, 3
    %p139 = pnand %p137, %p138
    %p140 = pneg %p139
    // Predicated region
    $region9: #{gaussian_falloff_velocity.1} parent=5 // pred_check
      _
    $region10: #{gaussian_falloff_velocity.1} parent=5 // pred_check_branch
      %142 = sbr.rel (%p139) target = $region12
    $region11: #{gaussian_falloff_velocity.1} parent=5 // pred_region
      %s143 = ssub.s32 %s9, 1
    $region12: #{gaussian_falloff_velocity.1} parent=5 // pred_fallthru
      _
    %p144 = scmp.lt.s32.totalorder %s9, 2
    // Predicated region
    $region13: #{gaussian_falloff_velocity.1} parent=5 // pred_check
      %p145 = pneg %p144
    $region14: #{gaussian_falloff_velocity.1} parent=5 // pred_check_branch
      %147 = sbr.rel (%p145) target = $region16
    $region15: #{gaussian_falloff_velocity.1} parent=5 // pred_region
      // Predicated region
      $region17: #{gaussian_falloff_velocity.1} parent=15 // pred_check
        %p148 = pneg %p41
      $region18: #{gaussian_falloff_velocity.1} parent=15 // pred_check_branch
        %150 = sbr.rel (%p148) target = $region20
      $region19: #{gaussian_falloff_velocity.1} parent=15 // pred_region
        %p151 = scmp.lt.s32.totalorder %s16, 1
        %s152 = scalar_select %p151, %s16, 1
        %s153 = smul.addr %s152, 8
        %s154 = scalar_lea.vmem %s0, %s153
      $region20: #{gaussian_falloff_velocity.1} parent=15 // pred_fallthru
        _
      // Predicated region
      $region21: #{gaussian_falloff_velocity.1} parent=15 // pred_check
        %p155 = pneg %p67
      $region22: #{gaussian_falloff_velocity.1} parent=15 // pred_check_branch
        %157 = sbr.rel (%p155) target = $region24
      $region23: #{gaussian_falloff_velocity.1} parent=15 // pred_region
        %p158 = scmp.lt.s32.totalorder %s16, 1
        %s159 = scalar_select %p158, %s16, 1
        %s160 = smul.addr %s159, 8
        %s161 = scalar_lea.vmem %s1, %s160
      $region24: #{gaussian_falloff_velocity.1} parent=15 // pred_fallthru
        _
      // Predicated region
      $region25: #{gaussian_falloff_velocity.1} parent=15 // pred_check
        %p162 = pneg %p95
      $region26: #{gaussian_falloff_velocity.1} parent=15 // pred_check_branch
        %164 = sbr.rel (%p162) target = $region28
      $region27: #{gaussian_falloff_velocity.1} parent=15 // pred_region
        %s165 = smul.u32 2, %s17
        %p166 = scmp.lt.s32.totalorder %s16, 1
        %s167 = scalar_select %p166, %s16, 1
        %p168 = scmp.lt.s32.totalorder %s165, 1
        %s169 = scalar_select %p168, %s165, 1
        %s170 = smul.addr %s167, 2
        %s171 = sadd.s32 %s169, %s170
        %s172 = smul.addr %s171, 2
        %s173 = scalar_lea.vmem %s2, %s172
        %s174 = smul.u32 2, %s17
      $region28: #{gaussian_falloff_velocity.1} parent=15 // pred_fallthru
        _
    $region16: #{gaussian_falloff_velocity.1} parent=5 // pred_fallthru
      _
    %p175 = scmp.le.s32.totalorder 1, %s9
    %p176 = scmp.lt.s32.totalorder %s9, 3
    %p177 = pnand %p175, %p176
    %p178 = pneg %p177
    // Predicated region
    $region29: #{gaussian_falloff_velocity.1} parent=5 // pred_check
      _
    $region30: #{gaussian_falloff_velocity.1} parent=5 // pred_check_branch
      %180 = sbr.rel (%p177) target = $region32
    $region31: #{gaussian_falloff_velocity.1} parent=5 // pred_region
      %s181 = ssub.s32 %s9, 1
      %p182 = scmp.lt.s32.totalorder %s18, 1
      %s183 = scalar_select %p182, %s18, 1
      %s184 = smul.addr %s183, 8
      %s185 = scalar_lea.vmem %s0, %s184
      %p186 = pneg %p47
      %p187 = pneg %p44
      %p188 = scmp.lt.s32.totalorder %s18, 1
      %s189 = scalar_select %p188, %s18, 1
      %s190 = smul.addr %s189, 8
      %s191 = scalar_lea.vmem %s1, %s190
      %p192 = pneg %p73
      %p193 = pneg %p70
      %s194 = smul.u32 2, %s19
      %p195 = scmp.lt.s32.totalorder %s18, 1
      %s196 = scalar_select %p195, %s18, 1
      %p197 = scmp.lt.s32.totalorder %s194, 1
      %s198 = scalar_select %p197, %s194, 1
      %s199 = smul.addr %s196, 2
      %s200 = sadd.s32 %s198, %s199
      %s201 = smul.addr %s200, 2
      %s202 = scalar_lea.vmem %s2, %s201
      %p203 = pneg %p101
      %p204 = pneg %p98
      %p205 = pneg %p129
      %p206 = pneg %p126
      %s207 = smul.u32 2, %s19
      %p208 = scmp.lt.s32.totalorder %s18, 1
      %s209 = scalar_select %p208, %s18, 1
      %p210 = scmp.lt.s32.totalorder %s207, 1
      %s211 = scalar_select %p210, %s207, 1
      %s212 = smul.addr %s209, 2
      %s213 = sadd.s32 %s211, %s212
      %s214 = smul.addr %s213, 2
      %s215 = scalar_lea.vmem %s3, %s214
      %p216 = scmp.lt.s32.totalorder %s18, 1
      %s217 = scalar_select %p216, %s18, 1
      %s218 = smul.addr %s217, 8
      %s219 = scalar_lea.vmem %s0, %s218
      %p220 = scmp.lt.s32.totalorder %s18, 1
      %s221 = scalar_select %p220, %s18, 1
      %s222 = smul.addr %s221, 8
      %s223 = scalar_lea.vmem %s1, %s222
      %s224 = smul.u32 2, %s19
      %p225 = scmp.lt.s32.totalorder %s18, 1
      %s226 = scalar_select %p225, %s18, 1
      %p227 = scmp.lt.s32.totalorder %s224, 1
      %s228 = scalar_select %p227, %s224, 1
      %s229 = smul.addr %s226, 2
      %s230 = sadd.s32 %s228, %s229
      %s231 = smul.addr %s230, 2
      %s232 = scalar_lea.vmem %s2, %s231
      %s233 = smul.u32 2, %s19
      %s234 = smul.u32 2, %s19
      %p235 = scmp.lt.s32.totalorder %s18, 1
      %s236 = scalar_select %p235, %s18, 1
      %p237 = scmp.lt.s32.totalorder %s234, 1
      %s238 = scalar_select %p237, %s234, 1
      %s239 = smul.addr %s236, 2
      %s240 = sadd.s32 %s238, %s239
      %s241 = smul.addr %s240, 2
      %s242 = scalar_lea.vmem %s3, %s241
      %s243 = smul.u32 2, %s19
      %v244 = vld [vmem:[%s232] ss:$2 sm:$0x3]
      %s245 = scalar_lea.vmem %s232, 1
      %v246 = vld [vmem:[%s245] ss:$2 sm:$0x3]
      %v247 = vld [vmem:[%s219] sm:$0xff]
      %v249 = vlaneseq
      %v250 = vshrl.u32 %v249, 7
      %v251 = vsub.s32 0, %v250
      %v252 = vrot.slane %v244, %v251
      %v253 = vlaneseq
      %v254 = vshrl.u32 %v253, 7
      %v255 = vsub.s32 1, %v254
      %v256 = vrot.slane %v244, %v255
      %260 = vset.pattern.permute.xlu0 0
      %261 = vperm.xlu0 %260, %v247
      %v262 = vpop.permute.xlu0 %261
      %v264 = vsub.f32 %v252, %v262
      %v265 = vsub.f32 %v256, %v262
      %v267 = vlaneseq
      %v268 = vshrl.u32 %v267, 7
      %v269 = vsub.s32 0, %v268
      %v270 = vrot.slane %v246, %v269
      %v271 = vlaneseq
      %v272 = vshrl.u32 %v271, 7
      %v273 = vsub.s32 1, %v272
      %v274 = vrot.slane %v246, %v273
      %277 = vset.pattern.permute.xlu0 1
      %278 = vperm.xlu0 %277, %v247
      %v279 = vpop.permute.xlu0 %278
      %v281 = vsub.f32 %v270, %v279
      %v282 = vsub.f32 %v274, %v279
      %v283 = vmul.f32 %v264, %v264
      %v284 = vmul.f32 %v265, %v265
      %v285 = vmul.f32 %v281, %v281
      %v286 = vmul.f32 %v282, %v282
      %v287 = vadd.f32 %v283, %v285
      %v288 = vadd.f32 %v284, %v286
      %289 = vset.pattern.permute.xlu0 3
      %290 = vperm.xlu0 %289, %v247
      %v291 = vpop.permute.xlu0 %290
      %v293 = vmul.f32 %v287, %v291
      %v294 = vmul.f32 %v288, %v291
      %v295 = vmul.f32 %v293, 1.442695
      %v296 = vpow.pop %v295
      %v297 = vmul.f32 %v294, 1.442695
      %v298 = vpow.pop %v297
      %v299 = vsub.f32 1.0, %v296
      %v300 = vsub.f32 1.0, %v298
      %301 = vset.pattern.permute.xlu0 2
      %302 = vperm.xlu0 %301, %v247
      %v303 = vpop.permute.xlu0 %302
      %v305 = vmul.f32 %v303, %v299
      %v306 = vmul.f32 %v303, %v300
      %v307 = vrcp.pop %v287
      %v308 = vmul.f32 %v305, %v307
      %v309 = vrcp.pop %v288
      %v310 = vmul.f32 %v306, %v309
      %v311 = vld [vmem:[%s223] sm:$0xff]
      %vm312 = vcmask 64512
      %v314 = vsel %vm312, %v311, 0
      %316 = vmatprep.subr.mxu0 %v310
      %317 = vmatpush1.msra.mxu0 %v308
      %318 = vmatprep.subr.mxu0 0.0
      %319 = vmatpush1.msra.mxu0 0.0
      %320 = vmatprep.subr.mxu0 0.0
      %321 = vmatpush1.msra.mxu0 0.0
      %322 = vmatprep.subr.mxu0 0.0
      %323 = vmatpush1.msra.mxu0 0.0
      %324 = vmatprep.subr.mxu0 0.0
      %325 = vmatpush1.msra.mxu0 0.0
      %326 = vmatprep.subr.mxu0 0.0
      %327 = vmatpush1.msra.mxu0 0.0
      %328 = vmatprep.subr.mxu0 0.0
      %329 = vmatpush1.msra.mxu0 0.0
      %330 = vmatprep.subr.mxu0 0.0
      %331 = vmatpush1.msra.mxu0 0.0
      %332 = vmatprep.subr.mxu0 0.0
      %333 = vmatpush1.msra.mxu0 0.0
      %334 = vmatprep.subr.mxu0 0.0
      %335 = vmatpush1.msra.mxu0 0.0
      %336 = vmatprep.subr.mxu0 0.0
      %337 = vmatpush1.msra.mxu0 0.0
      %338 = vmatprep.subr.mxu0 0.0
      %339 = vmatpush1.msra.mxu0 0.0
      %340 = vmatprep.subr.mxu0 0.0
      %341 = vmatpush1.msra.mxu0 0.0
      %342 = vmatprep.subr.mxu0 0.0
      %343 = vmatpush1.msra.mxu0 0.0
      %344 = vmatprep.subr.mxu0 0.0
      %345 = vmatpush1.msra.mxu0 0.0
      %346 = vmatprep.subr.mxu0 0.0
      %347 = vmatpush1.msra.mxu0 0.0
      %348 = vmatprep.subr.mxu0 0.0
      %349 = vmatpush1.msra.mxu0 0.0
      %350 = vmatprep.subr.mxu0 0.0
      %351 = vmatpush1.msra.mxu0 0.0
      %352 = vmatprep.subr.mxu0 0.0
      %353 = vmatpush1.msra.mxu0 0.0
      %354 = vmatprep.subr.mxu0 0.0
      %355 = vmatpush1.msra.mxu0 0.0
      %356 = vmatprep.subr.mxu0 0.0
      %357 = vmatpush1.msra.mxu0 0.0
      %358 = vmatprep.subr.mxu0 0.0
      %359 = vmatpush1.msra.mxu0 0.0
      %360 = vmatprep.subr.mxu0 0.0
      %361 = vmatpush1.msra.mxu0 0.0
      %362 = vmatprep.subr.mxu0 0.0
      %363 = vmatpush1.msra.mxu0 0.0
      %364 = vmatprep.subr.mxu0 0.0
      %365 = vmatpush1.msra.mxu0 0.0
      %366 = vmatprep.subr.mxu0 0.0
      %367 = vmatpush1.msra.mxu0 0.0
      %368 = vmatprep.subr.mxu0 0.0
      %369 = vmatpush1.msra.mxu0 0.0
      %370 = vmatprep.subr.mxu0 0.0
      %371 = vmatpush1.msra.mxu0 0.0
      %372 = vmatprep.subr.mxu0 0.0
      %373 = vmatpush1.msra.mxu0 0.0
      %374 = vmatprep.subr.mxu0 0.0
      %375 = vmatpush1.msra.mxu0 0.0
      %376 = vmatprep.subr.mxu0 0.0
      %377 = vmatpush1.msra.mxu0 0.0
      %378 = vmatprep.subr.mxu0 0.0
      %379 = vmatpush1.msra.mxu0 0.0
      %380 = vmatprep.mubr.f32.mxu0 0.0
      %381 = vmatmul.mubr.f32.gmra.mrb[0].mxu0 %v314
      %v382 = vpop.f32.mrb[0].mxu0
      %v383 = vadd.f32 0.0, %v382
      %v384 = vpop.f32.mrb[0].mxu0
      %v385 = vadd.f32 0.0, %v384
      %386 = vdwg.mxu0
      %v389 = vcombine.low %v383, %v385
      %v391 = vunpack.c.l.s4 1966171168
      %v392 = vunpack.c.0.s8 %v391
      %v393 = vlaneseq
      %v394 = vshrl.u32 %v393, 7
      %v395 = vsub.s32 %v392, %v394
      %v396 = vrot.slane %v389, %v395
      %v398 = vunpack.c.l.s4 1966171168
      %v399 = vunpack.c.0.s8 %v398
      %v400 = vlaneseq
      %v401 = vshrl.u32 %v400, 7
      %v402 = vsub.s32 %v399, %v401
      %v403 = vrot.slane %v396, %v402
      %v405 = vmul.f32 %v246, %v403
      %v406 = vcombine.high %v396, %v396
      %v408 = vunpack.c.l.s4 1966171168
      %v409 = vunpack.c.0.s8 %v408
      %v410 = vlaneseq
      %v411 = vshrl.u32 %v410, 7
      %v412 = vsub.s32 %v409, %v411
      %v413 = vrot.slane %v406, %v412
      %v415 = vsub.f32 %v405, %v413
      %v416 = vmul.f32 %v244, %v403
      %v418 = vlaneseq
      %v419 = vshrl.u32 %v418, 7
      %v420 = vsub.s32 0, %v419
      %v421 = vrot.slane %v416, %v420
      %v422 = vlaneseq
      %v423 = vshrl.u32 %v422, 7
      %v424 = vsub.s32 1, %v423
      %v425 = vrot.slane %v416, %v424
      %v428 = vsub.f32 %v383, %v421
      %v429 = vsub.f32 %v385, %v425
      %v431 = vlaneseq
      %v432 = vshrl.u32 %v431, 7
      %v433 = vsub.s32 0, %v432
      %v434 = vrot.slane %v415, %v433
      %v435 = vlaneseq
      %v436 = vshrl.u32 %v435, 7
      %v437 = vsub.s32 1, %v436
      %v438 = vrot.slane %v415, %v437
      %v443 = vrot.slane %v428, 1
      %v444 = vrot.slane %v429, 1
      %vm447 = vcmask 1040384
      %v448 = vsel %vm447, %v434, %v443
      %v449 = vsel %vm447, %v438, %v444
      %v452 = vcombine.low %v448, %v449
      %v454 = vunpack.c.l.s4 1983009808
      %v455 = vunpack.c.0.s8 %v454
      %v456 = vlaneseq
      %v457 = vshrl.u32 %v456, 7
      %v458 = vsub.s32 %v455, %v457
      %v459 = vrot.slane %v452, %v458
      %461 = vst [vmem:[%s242] sm:$0xf] %v459
      %s462 = smul.u32 2, %s19
      %p463 = scmp.lt.s32.totalorder %s18, 1
      %s464 = scalar_select %p463, %s18, 1
      %p465 = scmp.lt.s32.totalorder %s462, 1
      %s466 = scalar_select %p465, %s462, 1
      %s467 = smul.addr %s464, 2
      %s468 = sadd.s32 %s466, %s467
      %s469 = smul.addr %s468, 2
      %s470 = scalar_lea.vmem %s3, %s469
      // Predicated region
      $region33: #{gaussian_falloff_velocity.1} parent=31 // pred_check
        %p471 = pneg %p126
      $region34: #{gaussian_falloff_velocity.1} parent=31 // pred_check_branch
        %473 = sbr.rel (%p471) target = $region36
      $region35: #{gaussian_falloff_velocity.1} parent=31 // pred_region
        %s474 = smul.u32 2, %s19
      $region36: #{gaussian_falloff_velocity.1} parent=31 // pred_fallthru
        _
    $region32: #{gaussian_falloff_velocity.1} parent=5 // pred_fallthru
      _
    %p475 = scmp.le.s32.totalorder 2, %s9
    // Predicated region
    $region37: #{gaussian_falloff_velocity.1} parent=5 // pred_check
      %p476 = pneg %p475
    $region38: #{gaussian_falloff_velocity.1} parent=5 // pred_check_branch
      %478 = sbr.rel (%p476) target = $region40
    $region39: #{gaussian_falloff_velocity.1} parent=5 // pred_region
      %s479 = ssub.s32 %s9, 2
      // Predicated region
      $region41: #{gaussian_falloff_velocity.1} parent=39 // pred_check
        %p480 = pneg %p132
      $region42: #{gaussian_falloff_velocity.1} parent=39 // pred_check_branch
        %482 = sbr.rel (%p480) target = $region44
      $region43: #{gaussian_falloff_velocity.1} parent=39 // pred_region
        %s483 = smul.u32 2, %s21
        %p484 = scmp.lt.s32.totalorder %s20, 1
        %s485 = scalar_select %p484, %s20, 1
        %p486 = scmp.lt.s32.totalorder %s483, 1
        %s487 = scalar_select %p486, %s483, 1
        %s488 = smul.addr %s485, 2
        %s489 = sadd.s32 %s487, %s488
        %s490 = smul.addr %s489, 2
        %s491 = scalar_lea.vmem %s3, %s490
      $region44: #{gaussian_falloff_velocity.1} parent=39 // pred_fallthru
        _
    $region40: #{gaussian_falloff_velocity.1} parent=5 // pred_fallthru
      _
  $region6: #{gaussian_falloff_velocity.1} parent=0 // loop_footer
    %s13 = sadd.s32 1, %s9
  $region7: #{gaussian_falloff_velocity.1} parent=0 // loop_footer_branch
    %8 = sbr.rel target = $region3
  $region8: #{gaussian_falloff_velocity.1} parent=0 // loop_exit
    _

</llo_original>
